<compile_context>
chip_gen: v5e
topology: v5e:2x2
jax: 0.10.0
libtpu: 0.0.40
codegen_flags: <defaults>
</compile_context>

<pallas_src>
import functools
import math

import jax
import jax.numpy as jnp
from jax.experimental import pallas as pl
from jax.experimental.pallas import tpu as pltpu


def _pair(v):
    if isinstance(v, (tuple, list)):
        a, b = v
        return int(a), int(b)
    return int(v), int(v)


def _choose_lane_tile(BCp, per_lane_bytes, budget_bytes):
    """Largest lane (B*C) tile, preferring >= 2 grid steps (v7x megacore)."""
    cands = [c for c in (2048, 1024, 512, 384, 256, 128)
             if BCp % c == 0 and c * per_lane_bytes <= budget_bytes]
    for c in cands:                       # descending
        if BCp // c >= 2:
            return c
    return cands[0] if cands else 128


def _adaptive_conv_kernel(x_ref, w_ref, b_ref, o_ref, xpad_ref, *, kh, kw, sh,
                          sw, ph, pw, dh, dw, H, W, Ho, Wo, rb, tr):
    """One grid step = one lane tile of (batch*channel) planes.

    x_ref    : VMEM (lane, H*W)    natural-layout input block
    w_ref    : VMEM (kh*kw, lane)  per-channel taps as lane vectors
    b_ref    : VMEM (1, lane)      per-channel bias
    o_ref    : VMEM (lane, Ho*Wo)  natural-layout output block
    xpad_ref : VMEM (Hp, Wp, lane) f32 channels-last zero-padded input scratch
    """
    lane = o_ref.shape[0]
    Hp = H + 2 * ph
    Wp = W + 2 * pw
    f32 = jnp.float32

    # --- Stage 1: zero only the halo border strips (the interior is fully
    # rewritten every step, so this is stateless and safe under a "parallel"
    # megacore split of the grid axis).
    if ph > 0:
        xpad_ref[0:ph, :, :] = jnp.zeros((ph, Wp, lane), f32)
        xpad_ref[Hp - ph:Hp, :, :] = jnp.zeros((ph, Wp, lane), f32)
    if pw > 0:
        xpad_ref[ph:ph + H, 0:pw, :] = jnp.zeros((H, pw, lane), f32)
        xpad_ref[ph:ph + H, pw + W:Wp, :] = jnp.zeros((H, pw, lane), f32)

    # --- Stage 2: on-chip swizzle to channels-last.  The (lane, rows*W) ->
    # (rows*W, lane) transposes are plain 2-D f32 XLU transposes (aligned for
    # the lane-dense tiles), and writing the result into the scratch interior
    # *is* the transpose materialization - no extra VMEM->VMEM copy.
    for h0 in range(0, H, tr):
        hh = min(tr, H - h0)
        chunk = x_ref[:, h0 * W:(h0 + hh) * W].astype(f32)     # (lane, hh*W)
        chunk = jnp.transpose(chunk)                           # (hh*W, lane)
        xpad_ref[ph + h0:ph + h0 + hh, pw:pw + W, :] = chunk.reshape(hh, W, lane)

    # --- Stage 3: depthwise tap accumulation, channels on the lane axis,
    # f32 accumulation, row-blocked so the accumulator stays vreg-resident.
    w_all = w_ref[...].astype(f32)                       # (kh*kw, lane)
    b_vec = b_ref[...].astype(f32).reshape(1, 1, lane)   # (1, 1, lane)

    for r0 in range(0, Ho, rb):
        rbo = min(rb, Ho - r0)
        ri0 = r0 * sh
        rows_in = (rbo - 1) * sh + (kh - 1) * dh + 1
        acc = jnp.broadcast_to(b_vec, (rbo, Wo, lane))

        # j (column offset) outer: sublane-axis realignment once per column
        # offset instead of once per tap.
        for j in range(kw):
            c0 = j * dw
            if sw == 1:
                colj = xpad_ref[ri0:ri0 + rows_in, c0:c0 + Wo, :]
            else:
                # TODO(synk): stride>1 W path (strided slice on the loaded
                # value, not a strided pl.ds on the ref) is functionally
                # correct but untested on hardware per the review.
                colj = xpad_ref[ri0:ri0 + rows_in, c0:c0 + (Wo - 1) * sw + 1, :]
                colj = colj[:, ::sw, :]
            for i in range(kh):
                t0 = i * dh
                if sh == 1:
                    win = colj[t0:t0 + rbo]
                else:
                    win = colj[t0:t0 + (rbo - 1) * sh + 1:sh]
                wt = w_all[i * kw + j:i * kw + j + 1, :].reshape(1, 1, lane)
                acc = acc + win * wt

        # --- Stage 4: swizzle back to natural layout; lane-dense store.
        out_t = jnp.transpose(acc.reshape(rbo * Wo, lane))     # (lane, rbo*Wo)
        o_ref[:, r0 * Wo:r0 * Wo + rbo * Wo] = out_t.astype(o_ref.dtype)


def adaptive_conv2d(x, dyn_w, bias, *, stride=1, padding=0, dilation=1):
    """x: (B,C,H,W), dyn_w: (B,C,kh,kw), bias: (B*C,) -> (B,C,Ho,Wo)."""
    B, C, H, W = map(int, x.shape)
    kh, kw = int(dyn_w.shape[2]), int(dyn_w.shape[3])
    sh, sw = _pair(stride)
    ph, pw = _pair(padding)
    dh, dw = _pair(dilation)
    BC = B * C
    KK = kh * kw
    Ho = (H + 2 * ph - dh * (kh - 1) - 1) // sh + 1
    Wo = (W + 2 * pw - dw * (kw - 1) - 1) // sw + 1
    HW, HoWo = H * W, Ho * Wo
    Hp, Wp = H + 2 * ph, W + 2 * pw

    # Generation-aware VMEM budgets (v5e/v6e: 128 MiB, v7x: 64 MiB per core).
    try:
        vmem_cap = int(pltpu.get_tpu_info().vmem_capacity_bytes)
    except Exception:
        vmem_cap = 64 * 1024 * 1024
    budget = min(3 * vmem_cap // 8, 40 * 1024 * 1024) - (1 << 20)
    vmem_limit = int(min(3 * vmem_cap // 4, 96 * 1024 * 1024))

    itemsize = jnp.dtype(x.dtype).itemsize
    # Double-buffered in/out blocks + f32 pad scratch + taps/bias, per lane.
    per_lane = (2 * HW + 2 * HoWo) * itemsize + Hp * Wp * 4 + 2 * (KK + 1) * 4
    BCp = ((BC + 127) // 128) * 128           # lane-dense channel axis
    lane = _choose_lane_tile(BCp, per_lane, budget)

    # Row block: f32 accumulator <= ~128 KiB so it stays in vregs.
    rb = max(1, min(Ho, (128 * 1024) // max(1, Wo * lane * 4)))
    for r in range(rb, 0, -1):
        if (r * Wo) % 128 == 0:               # prefer lane-aligned store width
            rb = r
            break
    # Transpose chunk: <= ~512 KiB per chunk, prefer 128-aligned width.
    tr = max(1, min(H, (512 * 1024) // max(1, W * lane * 4)))
    for t in range(tr, 0, -1):
        if (t * W) % 128 == 0:
            tr = t
            break

    # Natural-layout reshapes only (no HBM transpose / copy of x or out when
    # B*C is already a multiple of 128).  The weight / bias transposes below
    # are O(B*C*kh*kw) bytes: negligible.
    x2 = x.reshape(BC, HW)
    w2 = jnp.transpose(dyn_w.reshape(BC, KK))         # (KK, BC)
    b2 = bias.reshape(1, BC)
    if BCp != BC:
        x2 = jnp.pad(x2, ((0, BCp - BC), (0, 0)))
        w2 = jnp.pad(w2, ((0, 0), (0, BCp - BC)))
        b2 = jnp.pad(b2, ((0, 0), (0, BCp - BC)))

    kernel = functools.partial(
        _adaptive_conv_kernel, kh=kh, kw=kw, sh=sh, sw=sw, ph=ph, pw=pw, dh=dh,
        dw=dw, H=H, W=W, Ho=Ho, Wo=Wo, rb=rb, tr=tr)

    out2 = pl.pallas_call(
        kernel,
        out_shape=jax.ShapeDtypeStruct((BCp, HoWo), x.dtype),
        grid=(BCp // lane,),
        in_specs=[
            pl.BlockSpec((lane, HW), lambda i: (i, 0)),
            pl.BlockSpec((KK, lane), lambda i: (0, i)),
            pl.BlockSpec((1, lane), lambda i: (0, i)),
        ],
        out_specs=pl.BlockSpec((lane, HoWo), lambda i: (i, 0)),
        scratch_shapes=[pltpu.VMEM((Hp, Wp, lane), jnp.float32)],
        compiler_params=pltpu.CompilerParams(
            dimension_semantics=("parallel",),
            vmem_limit_bytes=vmem_limit),
    )(x2, w2, b2)

    if BCp != BC:
        out2 = out2[:BC]
    return out2.reshape(B, C, Ho, Wo)


def ref_adaptive_conv2d(x, dyn_w, bias, *, stride=1, padding=0, dilation=1):
    """Pure-JAX reference mirroring the PyTorch forward exactly."""
    B, C, H, W = x.shape
    BC = B * C
    kh, kw = dyn_w.shape[2], dyn_w.shape[3]
    sh, sw = _pair(stride)
    ph, pw = _pair(padding)
    dh, dw = _pair(dilation)
    lhs = x.reshape(1, BC, H, W)
    rhs = dyn_w.reshape(BC, 1, kh, kw)
    out = jax.lax.conv_general_dilated(
        lhs, rhs,
        window_strides=(sh, sw),
        padding=((ph, ph), (pw, pw)),
        rhs_dilation=(dh, dw),
        feature_group_count=BC,
        dimension_numbers=("NCHW", "OIHW", "NCHW"),
    )
    out = out + bias.reshape(1, BC, 1, 1)
    return out.reshape(B, C, out.shape[2], out.shape[3])


if __name__ == "__main__":
    # The PyTorch module must be built with in_channels = out_channels =
    # groups = B*C for the grouped conv in forward() to type-check, so the
    # bias has B*C entries.
    B, C, H, W = 2, 4, 16, 16
    kh = kw = 3
    stride, padding, dilation = 1, 1, 1
    BC = B * C

    key = jax.random.PRNGKey(0)
    kx, kw_key, kb = jax.random.split(key, 3)
    x = jax.random.normal(kx, (B, C, H, W), dtype=jnp.float32)
    dyn_w = jax.random.normal(kw_key, (B, C, kh, kw), dtype=jnp.float32)

    # Deterministic bias matching _ConvNd.reset_parameters:
    # stdv = 1/sqrt(in_channels * kh * kw) with in_channels = B*C.
    stdv = 1.0 / math.sqrt(BC * kh * kw)
    bias = jax.random.uniform(
        kb, (BC,), dtype=jnp.float32, minval=-stdv, maxval=stdv)

    out = adaptive_conv2d(x, dyn_w, bias,
                          stride=stride, padding=padding, dilation=dilation)
    out = jax.block_until_ready(out)

    ref = ref_adaptive_conv2d(x, dyn_w, bias,
                              stride=stride, padding=padding, dilation=dilation)
    assert out.shape == ref.shape == (B, C, H, W), (out.shape, ref.shape)
    err = float(jnp.max(jnp.abs(out - ref)))
    assert err < 1e-4, err
    print("KERNEL_OK")
</pallas_src>

<mosaic_0001>
module attributes {stable_mosaic.version = 11 : i64} {
  func.func @_adaptive_conv_kernel(%arg0: i32, %arg1: memref<128x256xf32, #tpu.memory_space<vmem>>, %arg2: memref<9x128xf32, #tpu.memory_space<vmem>>, %arg3: memref<1x128xf32, #tpu.memory_space<vmem>>, %arg4: memref<128x256xf32, #tpu.memory_space<vmem>>, %arg5: memref<18x18x128xf32, #tpu.memory_space<vmem>>) attributes {dimension_semantics = [#tpu.dimension_semantics<parallel>], iteration_bounds = array<i64: 1>, scalar_prefetch = 0 : i64, scratch_operands = 1 : i64, tpu.core_type = #tpu.core_type<tc>, window_params = [{transform_indices = @transform_0, window_bounds = array<i64: 128, 256>}, {transform_indices = @transform_1, window_bounds = array<i64: 9, 128>}, {transform_indices = @transform_2, window_bounds = array<i64: 1, 128>}, {transform_indices = @transform_3, window_bounds = array<i64: 128, 256>}]} {
    %cst = arith.constant 0.000000e+00 : f32
    %0 = vector.broadcast %cst : f32 to vector<1x18x128xf32>
    %c0 = arith.constant 0 : index
    %c0_0 = arith.constant 0 : index
    %c0_1 = arith.constant 0 : index
    %1 = vector.load %arg5[%c0, %c0_0, %c0_1] : memref<18x18x128xf32, #tpu.memory_space<vmem>>, vector<1x18x128xf32>
    tpu.vector_store %arg5[%c0, %c0_0, %c0_1], %0 {strides = array<i32>} : memref<18x18x128xf32, #tpu.memory_space<vmem>>, vector<1x18x128xf32>,
    %cst_2 = arith.constant 0.000000e+00 : f32
    %2 = vector.broadcast %cst_2 : f32 to vector<1x18x128xf32>
    %c17 = arith.constant 17 : index
    %c0_3 = arith.constant 0 : index
    %c0_4 = arith.constant 0 : index
    %3 = vector.load %arg5[%c17, %c0_3, %c0_4] : memref<18x18x128xf32, #tpu.memory_space<vmem>>, vector<1x18x128xf32>
    tpu.vector_store %arg5[%c17, %c0_3, %c0_4], %2 {strides = array<i32>} : memref<18x18x128xf32, #tpu.memory_space<vmem>>, vector<1x18x128xf32>,
    %cst_5 = arith.constant 0.000000e+00 : f32
    %4 = vector.broadcast %cst_5 : f32 to vector<16x1x128xf32>
    %c1 = arith.constant 1 : index
    %c0_6 = arith.constant 0 : index
    %c0_7 = arith.constant 0 : index
    %5 = vector.load %arg5[%c1, %c0_6, %c0_7] : memref<18x18x128xf32, #tpu.memory_space<vmem>>, vector<16x1x128xf32>
    tpu.vector_store %arg5[%c1, %c0_6, %c0_7], %4 {strides = array<i32>} : memref<18x18x128xf32, #tpu.memory_space<vmem>>, vector<16x1x128xf32>,
    %cst_8 = arith.constant 0.000000e+00 : f32
    %6 = vector.broadcast %cst_8 : f32 to vector<16x1x128xf32>
    %c1_9 = arith.constant 1 : index
    %c17_10 = arith.constant 17 : index
    %c0_11 = arith.constant 0 : index
    %7 = vector.load %arg5[%c1_9, %c17_10, %c0_11] : memref<18x18x128xf32, #tpu.memory_space<vmem>>, vector<16x1x128xf32>
    tpu.vector_store %arg5[%c1_9, %c17_10, %c0_11], %6 {strides = array<i32>} : memref<18x18x128xf32, #tpu.memory_space<vmem>>, vector<16x1x128xf32>,
    %c0_12 = arith.constant 0 : index
    %c0_13 = arith.constant 0 : index
    %8 = vector.load %arg1[%c0_12, %c0_13] : memref<128x256xf32, #tpu.memory_space<vmem>>, vector<128x256xf32>
    %9 = tpu.transpose %8, [1, 0] : vector<128x256xf32> -> vector<256x128xf32>
    %10 = vector.shape_cast %9 : vector<256x128xf32> to vector<16x16x128xf32>
    %c1_14 = arith.constant 1 : index
    %c1_15 = arith.constant 1 : index
    %c0_16 = arith.constant 0 : index
    %11 = vector.load %arg5[%c1_14, %c1_15, %c0_16] : memref<18x18x128xf32, #tpu.memory_space<vmem>>, vector<16x16x128xf32>
    tpu.vector_store %arg5[%c1_14, %c1_15, %c0_16], %10 {strides = array<i32>} : memref<18x18x128xf32, #tpu.memory_space<vmem>>, vector<16x16x128xf32>,
    %c0_17 = arith.constant 0 : index
    %c0_18 = arith.constant 0 : index
    %12 = vector.load %arg2[%c0_17, %c0_18] : memref<9x128xf32, #tpu.memory_space<vmem>>, vector<9x128xf32>
    %c0_19 = arith.constant 0 : index
    %c0_20 = arith.constant 0 : index
    %13 = vector.load %arg3[%c0_19, %c0_20] : memref<1x128xf32, #tpu.memory_space<vmem>>, vector<1x128xf32>
    %14 = vector.shape_cast %13 : vector<1x128xf32> to vector<1x1x128xf32>
    %15 = vector.shape_cast %14 : vector<1x1x128xf32> to vector<1x1x128xf32>
    %16 = vector.broadcast %15 : vector<1x1x128xf32> to vector<16x16x128xf32>
    %c0_21 = arith.constant 0 : index
    %c0_22 = arith.constant 0 : index
    %c0_23 = arith.constant 0 : index
    %17 = vector.load %arg5[%c0_21, %c0_22, %c0_23] : memref<18x18x128xf32, #tpu.memory_space<vmem>>, vector<18x16x128xf32>
    %18 = vector.extract_strided_slice %17 {offsets = [0, 0, 0], sizes = [16, 16, 128], strides = [1, 1, 1]} : vector<18x16x128xf32> to vector<16x16x128xf32>
    %19 = vector.extract_strided_slice %12 {offsets = [0, 0], sizes = [1, 128], strides = [1, 1]} : vector<9x128xf32> to vector<1x128xf32>
    %20 = vector.shape_cast %19 : vector<1x128xf32> to vector<1x1x128xf32>
    %21 = vector.broadcast %20 : vector<1x1x128xf32> to vector<16x16x128xf32>
    %22 = arith.mulf %18, %21 : vector<16x16x128xf32>
    %23 = arith.addf %16, %22 : vector<16x16x128xf32>
    %24 = vector.extract_strided_slice %17 {offsets = [1, 0, 0], sizes = [16, 16, 128], strides = [1, 1, 1]} : vector<18x16x128xf32> to vector<16x16x128xf32>
    %25 = vector.extract_strided_slice %12 {offsets = [3, 0], sizes = [1, 128], strides = [1, 1]} : vector<9x128xf32> to vector<1x128xf32>
    %26 = vector.shape_cast %25 : vector<1x128xf32> to vector<1x1x128xf32>
    %27 = vector.broadcast %26 : vector<1x1x128xf32> to vector<16x16x128xf32>
    %28 = arith.mulf %24, %27 : vector<16x16x128xf32>
    %29 = arith.addf %23, %28 : vector<16x16x128xf32>
    %30 = vector.extract_strided_slice %17 {offsets = [2, 0, 0], sizes = [16, 16, 128], strides = [1, 1, 1]} : vector<18x16x128xf32> to vector<16x16x128xf32>
    %31 = vector.extract_strided_slice %12 {offsets = [6, 0], sizes = [1, 128], strides = [1, 1]} : vector<9x128xf32> to vector<1x128xf32>
    %32 = vector.shape_cast %31 : vector<1x128xf32> to vector<1x1x128xf32>
    %33 = vector.broadcast %32 : vector<1x1x128xf32> to vector<16x16x128xf32>
    %34 = arith.mulf %30, %33 : vector<16x16x128xf32>
    %35 = arith.addf %29, %34 : vector<16x16x128xf32>
    %c0_24 = arith.constant 0 : index
    %c1_25 = arith.constant 1 : index
    %c0_26 = arith.constant 0 : index
    %36 = vector.load %arg5[%c0_24, %c1_25, %c0_26] : memref<18x18x128xf32, #tpu.memory_space<vmem>>, vector<18x16x128xf32>
    %37 = vector.extract_strided_slice %36 {offsets = [0, 0, 0], sizes = [16, 16, 128], strides = [1, 1, 1]} : vector<18x16x128xf32> to vector<16x16x128xf32>
    %38 = vector.extract_strided_slice %12 {offsets = [1, 0], sizes = [1, 128], strides = [1, 1]} : vector<9x128xf32> to vector<1x128xf32>
    %39 = vector.shape_cast %38 : vector<1x128xf32> to vector<1x1x128xf32>
    %40 = vector.broadcast %39 : vector<1x1x128xf32> to vector<16x16x128xf32>
    %41 = arith.mulf %37, %40 : vector<16x16x128xf32>
    %42 = arith.addf %35, %41 : vector<16x16x128xf32>
    %43 = vector.extract_strided_slice %36 {offsets = [1, 0, 0], sizes = [16, 16, 128], strides = [1, 1, 1]} : vector<18x16x128xf32> to vector<16x16x128xf32>
    %44 = vector.extract_strided_slice %12 {offsets = [4, 0], sizes = [1, 128], strides = [1, 1]} : vector<9x128xf32> to vector<1x128xf32>
    %45 = vector.shape_cast %44 : vector<1x128xf32> to vector<1x1x128xf32>
    %46 = vector.broadcast %45 : vector<1x1x128xf32> to vector<16x16x128xf32>
    %47 = arith.mulf %43, %46 : vector<16x16x128xf32>
    %48 = arith.addf %42, %47 : vector<16x16x128xf32>
    %49 = vector.extract_strided_slice %36 {offsets = [2, 0, 0], sizes = [16, 16, 128], strides = [1, 1, 1]} : vector<18x16x128xf32> to vector<16x16x128xf32>
    %50 = vector.extract_strided_slice %12 {offsets = [7, 0], sizes = [1, 128], strides = [1, 1]} : vector<9x128xf32> to vector<1x128xf32>
    %51 = vector.shape_cast %50 : vector<1x128xf32> to vector<1x1x128xf32>
    %52 = vector.broadcast %51 : vector<1x1x128xf32> to vector<16x16x128xf32>
    %53 = arith.mulf %49, %52 : vector<16x16x128xf32>
    %54 = arith.addf %48, %53 : vector<16x16x128xf32>
    %c0_27 = arith.constant 0 : index
    %c2 = arith.constant 2 : index
    %c0_28 = arith.constant 0 : index
    %55 = vector.load %arg5[%c0_27, %c2, %c0_28] : memref<18x18x128xf32, #tpu.memory_space<vmem>>, vector<18x16x128xf32>
    %56 = vector.extract_strided_slice %55 {offsets = [0, 0, 0], sizes = [16, 16, 128], strides = [1, 1, 1]} : vector<18x16x128xf32> to vector<16x16x128xf32>
    %57 = vector.extract_strided_slice %12 {offsets = [2, 0], sizes = [1, 128], strides = [1, 1]} : vector<9x128xf32> to vector<1x128xf32>
    %58 = vector.shape_cast %57 : vector<1x128xf32> to vector<1x1x128xf32>
    %59 = vector.broadcast %58 : vector<1x1x128xf32> to vector<16x16x128xf32>
    %60 = arith.mulf %56, %59 : vector<16x16x128xf32>
    %61 = arith.addf %54, %60 : vector<16x16x128xf32>
    %62 = vector.extract_strided_slice %55 {offsets = [1, 0, 0], sizes = [16, 16, 128], strides = [1, 1, 1]} : vector<18x16x128xf32> to vector<16x16x128xf32>
    %63 = vector.extract_strided_slice %12 {offsets = [5, 0], sizes = [1, 128], strides = [1, 1]} : vector<9x128xf32> to vector<1x128xf32>
    %64 = vector.shape_cast %63 : vector<1x128xf32> to vector<1x1x128xf32>
    %65 = vector.broadcast %64 : vector<1x1x128xf32> to vector<16x16x128xf32>
    %66 = arith.mulf %62, %65 : vector<16x16x128xf32>
    %67 = arith.addf %61, %66 : vector<16x16x128xf32>
    %68 = vector.extract_strided_slice %55 {offsets = [2, 0, 0], sizes = [16, 16, 128], strides = [1, 1, 1]} : vector<18x16x128xf32> to vector<16x16x128xf32>
    %69 = vector.extract_strided_slice %12 {offsets = [8, 0], sizes = [1, 128], strides = [1, 1]} : vector<9x128xf32> to vector<1x128xf32>
    %70 = vector.shape_cast %69 : vector<1x128xf32> to vector<1x1x128xf32>
    %71 = vector.broadcast %70 : vector<1x1x128xf32> to vector<16x16x128xf32>
    %72 = arith.mulf %68, %71 : vector<16x16x128xf32>
    %73 = arith.addf %67, %72 : vector<16x16x128xf32>
    %74 = vector.shape_cast %73 : vector<16x16x128xf32> to vector<256x128xf32>
    %75 = tpu.transpose %74, [1, 0] : vector<256x128xf32> -> vector<128x256xf32>
    %c0_29 = arith.constant 0 : index
    %c0_30 = arith.constant 0 : index
    %76 = vector.load %arg4[%c0_29, %c0_30] : memref<128x256xf32, #tpu.memory_space<vmem>>, vector<128x256xf32>
    tpu.vector_store %arg4[%c0_29, %c0_30], %75 {strides = array<i32>} : memref<128x256xf32, #tpu.memory_space<vmem>>, vector<128x256xf32>,
    return
  }
  func.func @transform_0(%arg0: i32) -> (i32, i32) {
    %c0_i32 = arith.constant 0 : i32
    %c0_i32_0 = arith.constant 0 : i32
    return %arg0, %c0_i32 : i32, i32
  }
  func.func @transform_1(%arg0: i32) -> (i32, i32) {
    %c0_i32 = arith.constant 0 : i32
    %c0_i32_0 = arith.constant 0 : i32
    return %c0_i32, %arg0 : i32, i32
  }
  func.func @transform_2(%arg0: i32) -> (i32, i32) {
    %c0_i32 = arith.constant 0 : i32
    %c0_i32_0 = arith.constant 0 : i32
    return %c0_i32, %arg0 : i32, i32
  }
  func.func @transform_3(%arg0: i32) -> (i32, i32) {
    %c0_i32 = arith.constant 0 : i32
    %c0_i32_0 = arith.constant 0 : i32
    return %arg0, %c0_i32 : i32, i32
  }
}

</mosaic_0001>

<llo_original>
// kernel: tpu_custom_call.1
$region0: #{tpu_custom_call.1}
  #allocation0 [shape = 'u32[]', space=smem, size = 0x4, offset = 0x4, fixed_abs, tag = 'smem constant byte address 0x4 - core index']
  #allocation1 [shape = 'u32[72,128]{1,0:T(1,128)}', space=vmem, size = 0x9000, scoped, tag = 'internal scratch']
  #allocation2 [shape = 'f32[18,18,128]{2,1,0:T(8,128)}', space=vmem, size = 0x36000, scoped, tag = 'scratch operand']
  %s0 = inlined_call_operand.hbm [shape: f32[128,256], index: 0, kind: input, shape index: {}]
  %s1 = inlined_call_operand.hbm [shape: f32[9,128], index: 1, kind: input, shape index: {}]
  %s2 = inlined_call_operand.vmem [shape: f32[1,128], index: 2, kind: input, shape index: {}]
  %s3 = inlined_call_operand.hbm [shape: f32[128,256], index: 3, kind: output, shape index: {}]
  %s4 = sld [smem:[#allocation0]]
  $region30: #{tpu_custom_call.1} parent=0
    _
  %s6 = ssub.s32 1, %s4
  %s7 = scalar_select 0, %s6, %s4
  $region1: #{tpu_custom_call.1} parent=0
    #allocation3 [shape = 'u8[131072]{0}', space=vmem, size = 0x20000, scoped, tag = 'input window, operand 0, single buffered']
    #allocation4 [shape = 's32[1]{0}', space=sflag, size = 0x4, scoped, tag = 'scoped memory for tpu_custom_call.1']
    #allocation5 [shape = 's32[1]{0}', space=sflag, size = 0x4, scoped, tag = 'scoped memory for tpu_custom_call.1']
    #allocation6 [shape = 'u8[8192]{0}', space=vmem, size = 0x2000, scoped, tag = 'input window, operand 1, single buffered']
    #allocation7 [shape = 's32[1]{0}', space=sflag, size = 0x4, scoped, tag = 'scoped memory for tpu_custom_call.1']
    #allocation8 [shape = 'u8[131072]{0}', space=vmem, size = 0x20000, scoped, tag = 'output window, operand 0, single buffered']
    %8 = vsyncpa [#allocation4], 0
    %9 = vsyncpa [#allocation7], 0
    %10 = vsyncpa [#allocation5], 0
    // Predicated region
    $region2: #{tpu_custom_call.1} parent=1 // pred_check
      _
    $region3: #{tpu_custom_call.1} parent=1 // pred_check_branch
      %12 = sbr.rel (0) target = $region5
    $region4: #{tpu_custom_call.1} parent=1 // pred_region
      %14 = vsyncadd [#allocation4], 0
      %s15 = sshll.u32 %s0, 4
      %s16 = int_to_ptr.hbm [resolvable:$true] %s15
      %s17 = sshll.u32 [#allocation3], 4
      %s18 = int_to_ptr.vmem [resolvable:$true] %s17
      %23 = dma.hbm_to_vmem [thread:$0]  %s16, 4096, %s18, [#allocation4], 256, 256, 16
    $region5: #{tpu_custom_call.1} parent=1 // pred_fallthru
      _
    // Predicated region
    $region6: #{tpu_custom_call.1} parent=1 // pred_check
      _
    $region7: #{tpu_custom_call.1} parent=1 // pred_check_branch
      %25 = sbr.rel (0) target = $region9
    $region8: #{tpu_custom_call.1} parent=1 // pred_region
      %27 = vsyncadd [#allocation7], 0
      %s28 = sshll.u32 %s1, 4
      %s29 = int_to_ptr.hbm [resolvable:$true] %s28
      %s30 = sshll.u32 [#allocation6], 4
      %s31 = int_to_ptr.vmem [resolvable:$true] %s30
      %36 = dma.hbm_to_vmem [thread:$0]  %s29, 256, %s31, [#allocation7], 128, 128, 8
    $region9: #{tpu_custom_call.1} parent=1 // pred_fallthru
      _
    // Predicated region
    $region10: #{tpu_custom_call.1} parent=1 // pred_check
      _
    $region11: #{tpu_custom_call.1} parent=1 // pred_check_branch
      %38 = sbr.rel (0) target = $region13
    $region12: #{tpu_custom_call.1} parent=1 // pred_region
      _
    $region13: #{tpu_custom_call.1} parent=1 // pred_fallthru
      _
    // Predicated region
    $region14: #{tpu_custom_call.1} parent=1 // pred_check
      _
    $region15: #{tpu_custom_call.1} parent=1 // pred_check_branch
      %40 = sbr.rel (0) target = $region17
    $region16: #{tpu_custom_call.1} parent=1 // pred_region
      %42 = dma.done [#allocation4], 4096
    $region17: #{tpu_custom_call.1} parent=1 // pred_fallthru
      _
    // Predicated region
    $region18: #{tpu_custom_call.1} parent=1 // pred_check
      _
    $region19: #{tpu_custom_call.1} parent=1 // pred_check_branch
      %44 = sbr.rel (0) target = $region21
    $region20: #{tpu_custom_call.1} parent=1 // pred_region
      %46 = dma.done [#allocation7], 256
    $region21: #{tpu_custom_call.1} parent=1 // pred_fallthru
      _
    %47 = vst [vmem:[#allocation2] sm:$0xff] 0.0
    %48 = vst [vmem:[#allocation2 + $0x8] sm:$0xff] 0.0
    %49 = vst [vmem:[#allocation2 + $0x10] sm:$0x3] 0.0
    %s50 = scalar_lea.vmem [#allocation2], 408
    %51 = vst [vmem:[%s50] sm:$0xff] 0.0
    %52 = vst [vmem:[%s50 + $0x8] sm:$0xff] 0.0
    %53 = vst [vmem:[%s50 + $0x10] sm:$0x3] 0.0
    %s54 = scalar_lea.vmem [#allocation2], 24
    %55 = vst [vmem:[%s54] sm:$0x1] 0.0
    %56 = vst [vmem:[%s54 + $0x18] sm:$0x1] 0.0
    %57 = vst [vmem:[%s54 + $0x30] sm:$0x1] 0.0
    %58 = vst [vmem:[%s54 + $0x48] sm:$0x1] 0.0
    %59 = vst [vmem:[%s54 + $0x60] sm:$0x1] 0.0
    %60 = vst [vmem:[%s54 + $0x78] sm:$0x1] 0.0
    %61 = vst [vmem:[%s54 + $0x90] sm:$0x1] 0.0
    %62 = vst [vmem:[%s54 + $0xa8] sm:$0x1] 0.0
    %63 = vst [vmem:[%s54 + $0xc0] sm:$0x1] 0.0
    %64 = vst [vmem:[%s54 + $0xd8] sm:$0x1] 0.0
    %65 = vst [vmem:[%s54 + $0xf0] sm:$0x1] 0.0
    %66 = vst [vmem:[%s54 + $0x108] sm:$0x1] 0.0
    %67 = vst [vmem:[%s54 + $0x120] sm:$0x1] 0.0
    %68 = vst [vmem:[%s54 + $0x138] sm:$0x1] 0.0
    %69 = vst [vmem:[%s54 + $0x150] sm:$0x1] 0.0
    %70 = vst [vmem:[%s54 + $0x168] sm:$0x1] 0.0
    %71 = vst [vmem:[%s54 + $0x11] sm:$0x1] 0.0
    %72 = vst [vmem:[%s54 + $0x29] sm:$0x1] 0.0
    %73 = vst [vmem:[%s54 + $0x41] sm:$0x1] 0.0
    %74 = vst [vmem:[%s54 + $0x59] sm:$0x1] 0.0
    %75 = vst [vmem:[%s54 + $0x71] sm:$0x1] 0.0
    %76 = vst [vmem:[%s54 + $0x89] sm:$0x1] 0.0
    %77 = vst [vmem:[%s54 + $0xa1] sm:$0x1] 0.0
    %78 = vst [vmem:[%s54 + $0xb9] sm:$0x1] 0.0
    %79 = vst [vmem:[%s54 + $0xd1] sm:$0x1] 0.0
    %80 = vst [vmem:[%s54 + $0xe9] sm:$0x1] 0.0
    %81 = vst [vmem:[%s54 + $0x101] sm:$0x1] 0.0
    %82 = vst [vmem:[%s54 + $0x119] sm:$0x1] 0.0
    %83 = vst [vmem:[%s54 + $0x131] sm:$0x1] 0.0
    %84 = vst [vmem:[%s54 + $0x149] sm:$0x1] 0.0
    %85 = vst [vmem:[%s54 + $0x161] sm:$0x1] 0.0
    %86 = vst [vmem:[%s54 + $0x179] sm:$0x1] 0.0
    %v87 = vld [vmem:[#allocation3] sm:$0xff]
    %v88 = vld [vmem:[#allocation3 + $0x8] sm:$0xff]
    %v89 = vld [vmem:[#allocation3 + $0x10] sm:$0xff]
    %v90 = vld [vmem:[#allocation3 + $0x18] sm:$0xff]
    %v91 = vld [vmem:[#allocation3 + $0x20] sm:$0xff]
    %v92 = vld [vmem:[#allocation3 + $0x28] sm:$0xff]
    %v93 = vld [vmem:[#allocation3 + $0x30] sm:$0xff]
    %v94 = vld [vmem:[#allocation3 + $0x38] sm:$0xff]
    %v95 = vld [vmem:[#allocation3 + $0x40] sm:$0xff]
    %v96 = vld [vmem:[#allocation3 + $0x48] sm:$0xff]
    %v97 = vld [vmem:[#allocation3 + $0x50] sm:$0xff]
    %v98 = vld [vmem:[#allocation3 + $0x58] sm:$0xff]
    %v99 = vld [vmem:[#allocation3 + $0x60] sm:$0xff]
    %v100 = vld [vmem:[#allocation3 + $0x68] sm:$0xff]
    %v101 = vld [vmem:[#allocation3 + $0x70] sm:$0xff]
    %v102 = vld [vmem:[#allocation3 + $0x78] sm:$0xff]
    %v103 = vld [vmem:[#allocation3 + $0x80] sm:$0xff]
    %v104 = vld [vmem:[#allocation3 + $0x88] sm:$0xff]
    %v105 = vld [vmem:[#allocation3 + $0x90] sm:$0xff]
    %v106 = vld [vmem:[#allocation3 + $0x98] sm:$0xff]
    %v107 = vld [vmem:[#allocation3 + $0xa0] sm:$0xff]
    %v108 = vld [vmem:[#allocation3 + $0xa8] sm:$0xff]
    %v109 = vld [vmem:[#allocation3 + $0xb0] sm:$0xff]
    %v110 = vld [vmem:[#allocation3 + $0xb8] sm:$0xff]
    %v111 = vld [vmem:[#allocation3 + $0xc0] sm:$0xff]
    %v112 = vld [vmem:[#allocation3 + $0xc8] sm:$0xff]
    %v113 = vld [vmem:[#allocation3 + $0xd0] sm:$0xff]
    %v114 = vld [vmem:[#allocation3 + $0xd8] sm:$0xff]
    %v115 = vld [vmem:[#allocation3 + $0xe0] sm:$0xff]
    %v116 = vld [vmem:[#allocation3 + $0xe8] sm:$0xff]
    %v117 = vld [vmem:[#allocation3 + $0xf0] sm:$0xff]
    %v118 = vld [vmem:[#allocation3 + $0xf8] sm:$0xff]
    %119 = vxpose.xlu0.b32.start [1/16] %v87, 128
    %120 = vxpose.xlu0.b32.cont [2/16] %v89, 128
    %121 = vxpose.xlu0.b32.cont [3/16] %v91, 128
    %122 = vxpose.xlu0.b32.cont [4/16] %v93, 128
    %123 = vxpose.xlu0.b32.cont [5/16] %v95, 128
    %124 = vxpose.xlu0.b32.cont [6/16] %v97, 128
    %125 = vxpose.xlu0.b32.cont [7/16] %v99, 128
    %126 = vxpose.xlu0.b32.cont [8/16] %v101, 128
    %127 = vxpose.xlu0.b32.cont [9/16] %v103, 128
    %128 = vxpose.xlu0.b32.cont [10/16] %v105, 128
    %129 = vxpose.xlu0.b32.cont [11/16] %v107, 128
    %130 = vxpose.xlu0.b32.cont [12/16] %v109, 128
    %131 = vxpose.xlu0.b32.cont [13/16] %v111, 128
    %132 = vxpose.xlu0.b32.cont [14/16] %v113, 128
    %133 = vxpose.xlu0.b32.cont [15/16] %v115, 128
    %134 = vxpose.xlu0.b32.end [16/16] %v117, 128
    %v135 = vpop.trf.xlu0
    %v136 = vpop.trf.xlu0
    %v137 = vpop.trf.xlu0
    %v138 = vpop.trf.xlu0
    %v139 = vpop.trf.xlu0
    %v140 = vpop.trf.xlu0
    %v141 = vpop.trf.xlu0
    %v142 = vpop.trf.xlu0
    %v143 = vpop.trf.xlu0
    %v144 = vpop.trf.xlu0
    %v145 = vpop.trf.xlu0
    %v146 = vpop.trf.xlu0
    %v147 = vpop.trf.xlu0
    %v148 = vpop.trf.xlu0
    %v149 = vpop.trf.xlu0
    %v150 = vpop.trf.xlu0
    %151 = vxpose.xlu0.b32.start [1/16] %v88, 128
    %152 = vxpose.xlu0.b32.cont [2/16] %v90, 128
    %153 = vxpose.xlu0.b32.cont [3/16] %v92, 128
    %154 = vxpose.xlu0.b32.cont [4/16] %v94, 128
    %155 = vxpose.xlu0.b32.cont [5/16] %v96, 128
    %156 = vxpose.xlu0.b32.cont [6/16] %v98, 128
    %157 = vxpose.xlu0.b32.cont [7/16] %v100, 128
    %158 = vxpose.xlu0.b32.cont [8/16] %v102, 128
    %159 = vxpose.xlu0.b32.cont [9/16] %v104, 128
    %160 = vxpose.xlu0.b32.cont [10/16] %v106, 128
    %161 = vxpose.xlu0.b32.cont [11/16] %v108, 128
    %162 = vxpose.xlu0.b32.cont [12/16] %v110, 128
    %163 = vxpose.xlu0.b32.cont [13/16] %v112, 128
    %164 = vxpose.xlu0.b32.cont [14/16] %v114, 128
    %165 = vxpose.xlu0.b32.cont [15/16] %v116, 128
    %166 = vxpose.xlu0.b32.end [16/16] %v118, 128
    %v167 = vpop.trf.xlu0
    %v168 = vpop.trf.xlu0
    %v169 = vpop.trf.xlu0
    %v170 = vpop.trf.xlu0
    %v171 = vpop.trf.xlu0
    %v172 = vpop.trf.xlu0
    %v173 = vpop.trf.xlu0
    %v174 = vpop.trf.xlu0
    %v175 = vpop.trf.xlu0
    %v176 = vpop.trf.xlu0
    %v177 = vpop.trf.xlu0
    %v178 = vpop.trf.xlu0
    %v179 = vpop.trf.xlu0
    %v180 = vpop.trf.xlu0
    %v181 = vpop.trf.xlu0
    %v182 = vpop.trf.xlu0
    %183 = vst [vmem:[%s54 + $0x1] sm:$0xff] %v135
    %184 = vst [vmem:[%s54 + $0x9] sm:$0xff] %v136
    %185 = vst [vmem:[%s54 + $0x19] sm:$0xff] %v137
    %186 = vst [vmem:[%s54 + $0x21] sm:$0xff] %v138
    %187 = vst [vmem:[%s54 + $0x31] sm:$0xff] %v139
    %188 = vst [vmem:[%s54 + $0x39] sm:$0xff] %v140
    %189 = vst [vmem:[%s54 + $0x49] sm:$0xff] %v141
    %190 = vst [vmem:[%s54 + $0x51] sm:$0xff] %v142
    %191 = vst [vmem:[%s54 + $0x61] sm:$0xff] %v143
    %192 = vst [vmem:[%s54 + $0x69] sm:$0xff] %v144
    %193 = vst [vmem:[%s54 + $0x79] sm:$0xff] %v145
    %194 = vst [vmem:[%s54 + $0x81] sm:$0xff] %v146
    %195 = vst [vmem:[%s54 + $0x91] sm:$0xff] %v147
    %196 = vst [vmem:[%s54 + $0x99] sm:$0xff] %v148
    %197 = vst [vmem:[%s54 + $0xa9] sm:$0xff] %v149
    %198 = vst [vmem:[%s54 + $0xb1] sm:$0xff] %v150
    %199 = vst [vmem:[%s54 + $0xc1] sm:$0xff] %v167
    %200 = vst [vmem:[%s54 + $0xc9] sm:$0xff] %v168
    %201 = vst [vmem:[%s54 + $0xd9] sm:$0xff] %v169
    %202 = vst [vmem:[%s54 + $0xe1] sm:$0xff] %v170
    %203 = vst [vmem:[%s54 + $0xf1] sm:$0xff] %v171
    %204 = vst [vmem:[%s54 + $0xf9] sm:$0xff] %v172
    %205 = vst [vmem:[%s54 + $0x109] sm:$0xff] %v173
    %206 = vst [vmem:[%s54 + $0x111] sm:$0xff] %v174
    %207 = vst [vmem:[%s54 + $0x121] sm:$0xff] %v175
    %208 = vst [vmem:[%s54 + $0x129] sm:$0xff] %v176
    %209 = vst [vmem:[%s54 + $0x139] sm:$0xff] %v177
    %210 = vst [vmem:[%s54 + $0x141] sm:$0xff] %v178
    %211 = vst [vmem:[%s54 + $0x151] sm:$0xff] %v179
    %212 = vst [vmem:[%s54 + $0x159] sm:$0xff] %v180
    %213 = vst [vmem:[%s54 + $0x169] sm:$0xff] %v181
    %214 = vst [vmem:[%s54 + $0x171] sm:$0xff] %v182
    %v215 = vld [vmem:[#allocation6] sm:$0xff]
    %v216 = vld [vmem:[#allocation6 + $0x8] sm:$0x1]
    %v217 = vld [vmem:[%s2] sm:$0x1]
    %v219 = vperm.slane %v217, 0
    %v221 = vld [vmem:[#allocation2] sm:$0xff]
    %v222 = vld [vmem:[#allocation2 + $0x8] sm:$0xff]
    %v223 = vld [vmem:[#allocation2 + $0x18] sm:$0xff]
    %v224 = vld [vmem:[#allocation2 + $0x20] sm:$0xff]
    %v225 = vld [vmem:[#allocation2 + $0x30] sm:$0xff]
    %v226 = vld [vmem:[#allocation2 + $0x38] sm:$0xff]
    %v227 = vld [vmem:[#allocation2 + $0x48] sm:$0xff]
    %v228 = vld [vmem:[#allocation2 + $0x50] sm:$0xff]
    %v229 = vld [vmem:[#allocation2 + $0x60] sm:$0xff]
    %v230 = vld [vmem:[#allocation2 + $0x68] sm:$0xff]
    %v231 = vld [vmem:[#allocation2 + $0x78] sm:$0xff]
    %v232 = vld [vmem:[#allocation2 + $0x80] sm:$0xff]
    %v233 = vld [vmem:[#allocation2 + $0x90] sm:$0xff]
    %v234 = vld [vmem:[#allocation2 + $0x98] sm:$0xff]
    %v235 = vld [vmem:[#allocation2 + $0xa8] sm:$0xff]
    %v236 = vld [vmem:[#allocation2 + $0xb0] sm:$0xff]
    %v237 = vld [vmem:[#allocation2 + $0xc0] sm:$0xff]
    %v238 = vld [vmem:[#allocation2 + $0xc8] sm:$0xff]
    %v239 = vld [vmem:[#allocation2 + $0xd8] sm:$0xff]
    %v240 = vld [vmem:[#allocation2 + $0xe0] sm:$0xff]
    %v241 = vld [vmem:[#allocation2 + $0xf0] sm:$0xff]
    %v242 = vld [vmem:[#allocation2 + $0xf8] sm:$0xff]
    %v243 = vld [vmem:[#allocation2 + $0x108] sm:$0xff]
    %v244 = vld [vmem:[#allocation2 + $0x110] sm:$0xff]
    %v245 = vld [vmem:[#allocation2 + $0x120] sm:$0xff]
    %v246 = vld [vmem:[#allocation2 + $0x128] sm:$0xff]
    %v247 = vld [vmem:[#allocation2 + $0x138] sm:$0xff]
    %v248 = vld [vmem:[#allocation2 + $0x140] sm:$0xff]
    %v249 = vld [vmem:[#allocation2 + $0x150] sm:$0xff]
    %v250 = vld [vmem:[#allocation2 + $0x158] sm:$0xff]
    %v251 = vld [vmem:[#allocation2 + $0x168] sm:$0xff]
    %v252 = vld [vmem:[#allocation2 + $0x170] sm:$0xff]
    %v253 = vld [vmem:[#allocation2 + $0x180] sm:$0xff]
    %v254 = vld [vmem:[#allocation2 + $0x188] sm:$0xff]
    %v255 = vld [vmem:[#allocation2 + $0x198] sm:$0xff]
    %v256 = vld [vmem:[#allocation2 + $0x1a0] sm:$0xff]
    %v257 = vperm.slane %v215, 0
    %v258 = vmul.f32 %v221, %v257
    %v259 = vmul.f32 %v222, %v257
    %v260 = vmul.f32 %v223, %v257
    %v261 = vmul.f32 %v224, %v257
    %v262 = vmul.f32 %v225, %v257
    %v263 = vmul.f32 %v226, %v257
    %v264 = vmul.f32 %v227, %v257
    %v265 = vmul.f32 %v228, %v257
    %v266 = vmul.f32 %v229, %v257
    %v267 = vmul.f32 %v230, %v257
    %v268 = vmul.f32 %v231, %v257
    %v269 = vmul.f32 %v232, %v257
    %v270 = vmul.f32 %v233, %v257
    %v271 = vmul.f32 %v234, %v257
    %v272 = vmul.f32 %v235, %v257
    %v273 = vmul.f32 %v236, %v257
    %v274 = vmul.f32 %v237, %v257
    %v275 = vmul.f32 %v238, %v257
    %v276 = vmul.f32 %v239, %v257
    %v277 = vmul.f32 %v240, %v257
    %v278 = vmul.f32 %v241, %v257
    %v279 = vmul.f32 %v242, %v257
    %v280 = vmul.f32 %v243, %v257
    %v281 = vmul.f32 %v244, %v257
    %v282 = vmul.f32 %v245, %v257
    %v283 = vmul.f32 %v246, %v257
    %v284 = vmul.f32 %v247, %v257
    %v285 = vmul.f32 %v248, %v257
    %v286 = vmul.f32 %v249, %v257
    %v287 = vmul.f32 %v250, %v257
    %v288 = vmul.f32 %v251, %v257
    %v289 = vmul.f32 %v252, %v257
    %v290 = vadd.f32 %v219, %v258
    %v291 = vadd.f32 %v219, %v259
    %v292 = vadd.f32 %v219, %v260
    %v293 = vadd.f32 %v219, %v261
    %v294 = vadd.f32 %v219, %v262
    %v295 = vadd.f32 %v219, %v263
    %v296 = vadd.f32 %v219, %v264
    %v297 = vadd.f32 %v219, %v265
    %v298 = vadd.f32 %v219, %v266
    %v299 = vadd.f32 %v219, %v267
    %v300 = vadd.f32 %v219, %v268
    %v301 = vadd.f32 %v219, %v269
    %v302 = vadd.f32 %v219, %v270
    %v303 = vadd.f32 %v219, %v271
    %v304 = vadd.f32 %v219, %v272
    %v305 = vadd.f32 %v219, %v273
    %v306 = vadd.f32 %v219, %v274
    %v307 = vadd.f32 %v219, %v275
    %v308 = vadd.f32 %v219, %v276
    %v309 = vadd.f32 %v219, %v277
    %v310 = vadd.f32 %v219, %v278
    %v311 = vadd.f32 %v219, %v279
    %v312 = vadd.f32 %v219, %v280
    %v313 = vadd.f32 %v219, %v281
    %v314 = vadd.f32 %v219, %v282
    %v315 = vadd.f32 %v219, %v283
    %v316 = vadd.f32 %v219, %v284
    %v317 = vadd.f32 %v219, %v285
    %v318 = vadd.f32 %v219, %v286
    %v319 = vadd.f32 %v219, %v287
    %v320 = vadd.f32 %v219, %v288
    %v321 = vadd.f32 %v219, %v289
    %v322 = vperm.slane %v215, 3
    %v323 = vmul.f32 %v223, %v322
    %v324 = vmul.f32 %v224, %v322
    %v325 = vmul.f32 %v225, %v322
    %v326 = vmul.f32 %v226, %v322
    %v327 = vmul.f32 %v227, %v322
    %v328 = vmul.f32 %v228, %v322
    %v329 = vmul.f32 %v229, %v322
    %v330 = vmul.f32 %v230, %v322
    %v331 = vmul.f32 %v231, %v322
    %v332 = vmul.f32 %v232, %v322
    %v333 = vmul.f32 %v233, %v322
    %v334 = vmul.f32 %v234, %v322
    %v335 = vmul.f32 %v235, %v322
    %v336 = vmul.f32 %v236, %v322
    %v337 = vmul.f32 %v237, %v322
    %v338 = vmul.f32 %v238, %v322
    %v339 = vmul.f32 %v239, %v322
    %v340 = vmul.f32 %v240, %v322
    %v341 = vmul.f32 %v241, %v322
    %v342 = vmul.f32 %v242, %v322
    %v343 = vmul.f32 %v243, %v322
    %v344 = vmul.f32 %v244, %v322
    %v345 = vmul.f32 %v245, %v322
    %v346 = vmul.f32 %v246, %v322
    %v347 = vmul.f32 %v247, %v322
    %v348 = vmul.f32 %v248, %v322
    %v349 = vmul.f32 %v249, %v322
    %v350 = vmul.f32 %v250, %v322
    %v351 = vmul.f32 %v251, %v322
    %v352 = vmul.f32 %v252, %v322
    %v353 = vmul.f32 %v253, %v322
    %v354 = vmul.f32 %v254, %v322
    %v355 = vadd.f32 %v290, %v323
    %v356 = vadd.f32 %v291, %v324
    %v357 = vadd.f32 %v292, %v325
    %v358 = vadd.f32 %v293, %v326
    %v359 = vadd.f32 %v294, %v327
    %v360 = vadd.f32 %v295, %v328
    %v361 = vadd.f32 %v296, %v329
    %v362 = vadd.f32 %v297, %v330
    %v363 = vadd.f32 %v298, %v331
    %v364 = vadd.f32 %v299, %v332
    %v365 = vadd.f32 %v300, %v333
    %v366 = vadd.f32 %v301, %v334
    %v367 = vadd.f32 %v302, %v335
    %v368 = vadd.f32 %v303, %v336
    %v369 = vadd.f32 %v304, %v337
    %v370 = vadd.f32 %v305, %v338
    %v371 = vadd.f32 %v306, %v339
    %v372 = vadd.f32 %v307, %v340
    %v373 = vadd.f32 %v308, %v341
    %v374 = vadd.f32 %v309, %v342
    %v375 = vadd.f32 %v310, %v343
    %v376 = vadd.f32 %v311, %v344
    %v377 = vadd.f32 %v312, %v345
    %v378 = vadd.f32 %v313, %v346
    %v379 = vadd.f32 %v314, %v347
    %v380 = vadd.f32 %v315, %v348
    %v381 = vadd.f32 %v316, %v349
    %v382 = vadd.f32 %v317, %v350
    %v383 = vadd.f32 %v318, %v351
    %v384 = vadd.f32 %v319, %v352
    %v385 = vadd.f32 %v320, %v353
    %v386 = vadd.f32 %v321, %v354
    %v387 = vperm.slane %v215, 6
    %v388 = vmul.f32 %v225, %v387
    %v389 = vmul.f32 %v226, %v387
    %v390 = vmul.f32 %v227, %v387
    %v391 = vmul.f32 %v228, %v387
    %v392 = vmul.f32 %v229, %v387
    %v393 = vmul.f32 %v230, %v387
    %v394 = vmul.f32 %v231, %v387
    %v395 = vmul.f32 %v232, %v387
    %v396 = vmul.f32 %v233, %v387
    %v397 = vmul.f32 %v234, %v387
    %v398 = vmul.f32 %v235, %v387
    %v399 = vmul.f32 %v236, %v387
    %v400 = vmul.f32 %v237, %v387
    %v401 = vmul.f32 %v238, %v387
    %v402 = vmul.f32 %v239, %v387
    %v403 = vmul.f32 %v240, %v387
    %v404 = vmul.f32 %v241, %v387
    %v405 = vmul.f32 %v242, %v387
    %v406 = vmul.f32 %v243, %v387
    %v407 = vmul.f32 %v244, %v387
    %v408 = vmul.f32 %v245, %v387
    %v409 = vmul.f32 %v246, %v387
    %v410 = vmul.f32 %v247, %v387
    %v411 = vmul.f32 %v248, %v387
    %v412 = vmul.f32 %v249, %v387
    %v413 = vmul.f32 %v250, %v387
    %v414 = vmul.f32 %v251, %v387
    %v415 = vmul.f32 %v252, %v387
    %v416 = vmul.f32 %v253, %v387
    %v417 = vmul.f32 %v254, %v387
    %v418 = vmul.f32 %v255, %v387
    %v419 = vmul.f32 %v256, %v387
    %v420 = vadd.f32 %v355, %v388
    %v421 = vadd.f32 %v356, %v389
    %v422 = vadd.f32 %v357, %v390
    %v423 = vadd.f32 %v358, %v391
    %v424 = vadd.f32 %v359, %v392
    %v425 = vadd.f32 %v360, %v393
    %v426 = vadd.f32 %v361, %v394
    %v427 = vadd.f32 %v362, %v395
    %v428 = vadd.f32 %v363, %v396
    %v429 = vadd.f32 %v364, %v397
    %v430 = vadd.f32 %v365, %v398
    %v431 = vadd.f32 %v366, %v399
    %v432 = vadd.f32 %v367, %v400
    %v433 = vadd.f32 %v368, %v401
    %v434 = vadd.f32 %v369, %v402
    %v435 = vadd.f32 %v370, %v403
    %v436 = vadd.f32 %v371, %v404
    %v437 = vadd.f32 %v372, %v405
    %v438 = vadd.f32 %v373, %v406
    %v439 = vadd.f32 %v374, %v407
    %v440 = vadd.f32 %v375, %v408
    %v441 = vadd.f32 %v376, %v409
    %v442 = vadd.f32 %v377, %v410
    %v443 = vadd.f32 %v378, %v411
    %v444 = vadd.f32 %v379, %v412
    %v445 = vadd.f32 %v380, %v413
    %v446 = vadd.f32 %v381, %v414
    %v447 = vadd.f32 %v382, %v415
    %v448 = vadd.f32 %v383, %v416
    %v449 = vadd.f32 %v384, %v417
    %v450 = vadd.f32 %v385, %v418
    %v451 = vadd.f32 %v386, %v419
    %v452 = vld [vmem:[#allocation2 + $0x1] sm:$0xff]
    %v453 = vld [vmem:[#allocation2 + $0x9] sm:$0xff]
    %v454 = vld [vmem:[#allocation2 + $0x19] sm:$0xff]
    %v455 = vld [vmem:[#allocation2 + $0x21] sm:$0xff]
    %v456 = vld [vmem:[#allocation2 + $0x31] sm:$0xff]
    %v457 = vld [vmem:[#allocation2 + $0x39] sm:$0xff]
    %v458 = vld [vmem:[#allocation2 + $0x49] sm:$0xff]
    %v459 = vld [vmem:[#allocation2 + $0x51] sm:$0xff]
    %v460 = vld [vmem:[#allocation2 + $0x61] sm:$0xff]
    %v461 = vld [vmem:[#allocation2 + $0x69] sm:$0xff]
    %v462 = vld [vmem:[#allocation2 + $0x79] sm:$0xff]
    %v463 = vld [vmem:[#allocation2 + $0x81] sm:$0xff]
    %v464 = vld [vmem:[#allocation2 + $0x91] sm:$0xff]
    %v465 = vld [vmem:[#allocation2 + $0x99] sm:$0xff]
    %v466 = vld [vmem:[#allocation2 + $0xa9] sm:$0xff]
    %v467 = vld [vmem:[#allocation2 + $0xb1] sm:$0xff]
    %v468 = vld [vmem:[#allocation2 + $0xc1] sm:$0xff]
    %v469 = vld [vmem:[#allocation2 + $0xc9] sm:$0xff]
    %v470 = vld [vmem:[#allocation2 + $0xd9] sm:$0xff]
    %v471 = vld [vmem:[#allocation2 + $0xe1] sm:$0xff]
    %v472 = vld [vmem:[#allocation2 + $0xf1] sm:$0xff]
    %v473 = vld [vmem:[#allocation2 + $0xf9] sm:$0xff]
    %v474 = vld [vmem:[#allocation2 + $0x109] sm:$0xff]
    %v475 = vld [vmem:[#allocation2 + $0x111] sm:$0xff]
    %v476 = vld [vmem:[#allocation2 + $0x121] sm:$0xff]
    %v477 = vld [vmem:[#allocation2 + $0x129] sm:$0xff]
    %v478 = vld [vmem:[#allocation2 + $0x139] sm:$0xff]
    %v479 = vld [vmem:[#allocation2 + $0x141] sm:$0xff]
    %v480 = vld [vmem:[#allocation2 + $0x151] sm:$0xff]
    %v481 = vld [vmem:[#allocation2 + $0x159] sm:$0xff]
    %v482 = vld [vmem:[#allocation2 + $0x169] sm:$0xff]
    %v483 = vld [vmem:[#allocation2 + $0x171] sm:$0xff]
    %v484 = vld [vmem:[#allocation2 + $0x181] sm:$0xff]
    %v485 = vld [vmem:[#allocation2 + $0x189] sm:$0xff]
    %v486 = vld [vmem:[#allocation2 + $0x199] sm:$0xff]
    %v487 = vld [vmem:[#allocation2 + $0x1a1] sm:$0xff]
    %v488 = vperm.slane %v215, 1
    %v489 = vmul.f32 %v452, %v488
    %v490 = vmul.f32 %v453, %v488
    %v491 = vmul.f32 %v454, %v488
    %v492 = vmul.f32 %v455, %v488
    %v493 = vmul.f32 %v456, %v488
    %v494 = vmul.f32 %v457, %v488
    %v495 = vmul.f32 %v458, %v488
    %v496 = vmul.f32 %v459, %v488
    %v497 = vmul.f32 %v460, %v488
    %v498 = vmul.f32 %v461, %v488
    %v499 = vmul.f32 %v462, %v488
    %v500 = vmul.f32 %v463, %v488
    %v501 = vmul.f32 %v464, %v488
    %v502 = vmul.f32 %v465, %v488
    %v503 = vmul.f32 %v466, %v488
    %v504 = vmul.f32 %v467, %v488
    %v505 = vmul.f32 %v468, %v488
    %v506 = vmul.f32 %v469, %v488
    %v507 = vmul.f32 %v470, %v488
    %v508 = vmul.f32 %v471, %v488
    %v509 = vmul.f32 %v472, %v488
    %v510 = vmul.f32 %v473, %v488
    %v511 = vmul.f32 %v474, %v488
    %v512 = vmul.f32 %v475, %v488
    %v513 = vmul.f32 %v476, %v488
    %v514 = vmul.f32 %v477, %v488
    %v515 = vmul.f32 %v478, %v488
    %v516 = vmul.f32 %v479, %v488
    %v517 = vmul.f32 %v480, %v488
    %v518 = vmul.f32 %v481, %v488
    %v519 = vmul.f32 %v482, %v488
    %v520 = vmul.f32 %v483, %v488
    %v521 = vadd.f32 %v420, %v489
    %v522 = vadd.f32 %v421, %v490
    %v523 = vadd.f32 %v422, %v491
    %v524 = vadd.f32 %v423, %v492
    %v525 = vadd.f32 %v424, %v493
    %v526 = vadd.f32 %v425, %v494
    %v527 = vadd.f32 %v426, %v495
    %v528 = vadd.f32 %v427, %v496
    %v529 = vadd.f32 %v428, %v497
    %v530 = vadd.f32 %v429, %v498
    %v531 = vadd.f32 %v430, %v499
    %v532 = vadd.f32 %v431, %v500
    %v533 = vadd.f32 %v432, %v501
    %v534 = vadd.f32 %v433, %v502
    %v535 = vadd.f32 %v434, %v503
    %v536 = vadd.f32 %v435, %v504
    %v537 = vadd.f32 %v436, %v505
    %v538 = vadd.f32 %v437, %v506
    %v539 = vadd.f32 %v438, %v507
    %v540 = vadd.f32 %v439, %v508
    %v541 = vadd.f32 %v440, %v509
    %v542 = vadd.f32 %v441, %v510
    %v543 = vadd.f32 %v442, %v511
    %v544 = vadd.f32 %v443, %v512
    %v545 = vadd.f32 %v444, %v513
    %v546 = vadd.f32 %v445, %v514
    %v547 = vadd.f32 %v446, %v515
    %v548 = vadd.f32 %v447, %v516
    %v549 = vadd.f32 %v448, %v517
    %v550 = vadd.f32 %v449, %v518
    %v551 = vadd.f32 %v450, %v519
    %v552 = vadd.f32 %v451, %v520
    %v553 = vperm.slane %v215, 4
    %v554 = vmul.f32 %v454, %v553
    %v555 = vmul.f32 %v455, %v553
    %v556 = vmul.f32 %v456, %v553
    %v557 = vmul.f32 %v457, %v553
    %v558 = vmul.f32 %v458, %v553
    %v559 = vmul.f32 %v459, %v553
    %v560 = vmul.f32 %v460, %v553
    %v561 = vmul.f32 %v461, %v553
    %v562 = vmul.f32 %v462, %v553
    %v563 = vmul.f32 %v463, %v553
    %v564 = vmul.f32 %v464, %v553
    %v565 = vmul.f32 %v465, %v553
    %v566 = vmul.f32 %v466, %v553
    %v567 = vmul.f32 %v467, %v553
    %v568 = vmul.f32 %v468, %v553
    %v569 = vmul.f32 %v469, %v553
    %v570 = vmul.f32 %v470, %v553
    %v571 = vmul.f32 %v471, %v553
    %v572 = vmul.f32 %v472, %v553
    %v573 = vmul.f32 %v473, %v553
    %v574 = vmul.f32 %v474, %v553
    %v575 = vmul.f32 %v475, %v553
    %v576 = vmul.f32 %v476, %v553
    %v577 = vmul.f32 %v477, %v553
    %v578 = vmul.f32 %v478, %v553
    %v579 = vmul.f32 %v479, %v553
    %v580 = vmul.f32 %v480, %v553
    %v581 = vmul.f32 %v481, %v553
    %v582 = vmul.f32 %v482, %v553
    %v583 = vmul.f32 %v483, %v553
    %v584 = vmul.f32 %v484, %v553
    %v585 = vmul.f32 %v485, %v553
    %v586 = vadd.f32 %v521, %v554
    %v587 = vadd.f32 %v522, %v555
    %v588 = vadd.f32 %v523, %v556
    %v589 = vadd.f32 %v524, %v557
    %v590 = vadd.f32 %v525, %v558
    %v591 = vadd.f32 %v526, %v559
    %v592 = vadd.f32 %v527, %v560
    %v593 = vadd.f32 %v528, %v561
    %v594 = vadd.f32 %v529, %v562
    %v595 = vadd.f32 %v530, %v563
    %v596 = vadd.f32 %v531, %v564
    %v597 = vadd.f32 %v532, %v565
    %v598 = vadd.f32 %v533, %v566
    %v599 = vadd.f32 %v534, %v567
    %v600 = vadd.f32 %v535, %v568
    %v601 = vadd.f32 %v536, %v569
    %v602 = vadd.f32 %v537, %v570
    %v603 = vadd.f32 %v538, %v571
    %v604 = vadd.f32 %v539, %v572
    %v605 = vadd.f32 %v540, %v573
    %v606 = vadd.f32 %v541, %v574
    %v607 = vadd.f32 %v542, %v575
    %v608 = vadd.f32 %v543, %v576
    %v609 = vadd.f32 %v544, %v577
    %v610 = vadd.f32 %v545, %v578
    %v611 = vadd.f32 %v546, %v579
    %v612 = vadd.f32 %v547, %v580
    %v613 = vadd.f32 %v548, %v581
    %v614 = vadd.f32 %v549, %v582
    %v615 = vadd.f32 %v550, %v583
    %v616 = vadd.f32 %v551, %v584
    %v617 = vadd.f32 %v552, %v585
    %v618 = vperm.slane %v215, 7
    %v619 = vmul.f32 %v456, %v618
    %v620 = vmul.f32 %v457, %v618
    %v621 = vmul.f32 %v458, %v618
    %v622 = vmul.f32 %v459, %v618
    %v623 = vmul.f32 %v460, %v618
    %v624 = vmul.f32 %v461, %v618
    %v625 = vmul.f32 %v462, %v618
    %v626 = vmul.f32 %v463, %v618
    %v627 = vmul.f32 %v464, %v618
    %v628 = vmul.f32 %v465, %v618
    %v629 = vmul.f32 %v466, %v618
    %v630 = vmul.f32 %v467, %v618
    %v631 = vmul.f32 %v468, %v618
    %v632 = vmul.f32 %v469, %v618
    %v633 = vmul.f32 %v470, %v618
    %v634 = vmul.f32 %v471, %v618
    %v635 = vmul.f32 %v472, %v618
    %v636 = vmul.f32 %v473, %v618
    %v637 = vmul.f32 %v474, %v618
    %v638 = vmul.f32 %v475, %v618
    %v639 = vmul.f32 %v476, %v618
    %v640 = vmul.f32 %v477, %v618
    %v641 = vmul.f32 %v478, %v618
    %v642 = vmul.f32 %v479, %v618
    %v643 = vmul.f32 %v480, %v618
    %v644 = vmul.f32 %v481, %v618
    %v645 = vmul.f32 %v482, %v618
    %v646 = vmul.f32 %v483, %v618
    %v647 = vmul.f32 %v484, %v618
    %v648 = vmul.f32 %v485, %v618
    %v649 = vmul.f32 %v486, %v618
    %v650 = vmul.f32 %v487, %v618
    %v651 = vadd.f32 %v586, %v619
    %v652 = vadd.f32 %v587, %v620
    %v653 = vadd.f32 %v588, %v621
    %v654 = vadd.f32 %v589, %v622
    %v655 = vadd.f32 %v590, %v623
    %v656 = vadd.f32 %v591, %v624
    %v657 = vadd.f32 %v592, %v625
    %v658 = vadd.f32 %v593, %v626
    %v659 = vadd.f32 %v594, %v627
    %v660 = vadd.f32 %v595, %v628
    %v661 = vadd.f32 %v596, %v629
    %v662 = vadd.f32 %v597, %v630
    %v663 = vadd.f32 %v598, %v631
    %v664 = vadd.f32 %v599, %v632
    %v665 = vadd.f32 %v600, %v633
    %v666 = vadd.f32 %v601, %v634
    %v667 = vadd.f32 %v602, %v635
    %v668 = vadd.f32 %v603, %v636
    %v669 = vadd.f32 %v604, %v637
    %v670 = vadd.f32 %v605, %v638
    %v671 = vadd.f32 %v606, %v639
    %v672 = vadd.f32 %v607, %v640
    %v673 = vadd.f32 %v608, %v641
    %v674 = vadd.f32 %v609, %v642
    %v675 = vadd.f32 %v610, %v643
    %v676 = vadd.f32 %v611, %v644
    %v677 = vadd.f32 %v612, %v645
    %v678 = vadd.f32 %v613, %v646
    %v679 = vadd.f32 %v614, %v647
    %v680 = vadd.f32 %v615, %v648
    %v681 = vadd.f32 %v616, %v649
    %v682 = vadd.f32 %v617, %v650
    %v683 = vld [vmem:[#allocation2 + $0x2] sm:$0xff]
    %v684 = vld [vmem:[#allocation2 + $0xa] sm:$0xff]
    %v685 = vld [vmem:[#allocation2 + $0x1a] sm:$0xff]
    %v686 = vld [vmem:[#allocation2 + $0x22] sm:$0xff]
    %v687 = vld [vmem:[#allocation2 + $0x32] sm:$0xff]
    %v688 = vld [vmem:[#allocation2 + $0x3a] sm:$0xff]
    %v689 = vld [vmem:[#allocation2 + $0x4a] sm:$0xff]
    %v690 = vld [vmem:[#allocation2 + $0x52] sm:$0xff]
    %v691 = vld [vmem:[#allocation2 + $0x62] sm:$0xff]
    %v692 = vld [vmem:[#allocation2 + $0x6a] sm:$0xff]
    %v693 = vld [vmem:[#allocation2 + $0x7a] sm:$0xff]
    %v694 = vld [vmem:[#allocation2 + $0x82] sm:$0xff]
    %v695 = vld [vmem:[#allocation2 + $0x92] sm:$0xff]
    %v696 = vld [vmem:[#allocation2 + $0x9a] sm:$0xff]
    %v697 = vld [vmem:[#allocation2 + $0xaa] sm:$0xff]
    %v698 = vld [vmem:[#allocation2 + $0xb2] sm:$0xff]
    %v699 = vld [vmem:[#allocation2 + $0xc2] sm:$0xff]
    %v700 = vld [vmem:[#allocation2 + $0xca] sm:$0xff]
    %v701 = vld [vmem:[#allocation2 + $0xda] sm:$0xff]
    %v702 = vld [vmem:[#allocation2 + $0xe2] sm:$0xff]
    %v703 = vld [vmem:[#allocation2 + $0xf2] sm:$0xff]
    %v704 = vld [vmem:[#allocation2 + $0xfa] sm:$0xff]
    %v705 = vld [vmem:[#allocation2 + $0x10a] sm:$0xff]
    %v706 = vld [vmem:[#allocation2 + $0x112] sm:$0xff]
    %v707 = vld [vmem:[#allocation2 + $0x122] sm:$0xff]
    %v708 = vld [vmem:[#allocation2 + $0x12a] sm:$0xff]
    %v709 = vld [vmem:[#allocation2 + $0x13a] sm:$0xff]
    %v710 = vld [vmem:[#allocation2 + $0x142] sm:$0xff]
    %v711 = vld [vmem:[#allocation2 + $0x152] sm:$0xff]
    %v712 = vld [vmem:[#allocation2 + $0x15a] sm:$0xff]
    %v713 = vld [vmem:[#allocation2 + $0x16a] sm:$0xff]
    %v714 = vld [vmem:[#allocation2 + $0x172] sm:$0xff]
    %v715 = vld [vmem:[#allocation2 + $0x182] sm:$0xff]
    %v716 = vld [vmem:[#allocation2 + $0x18a] sm:$0xff]
    %v717 = vld [vmem:[#allocation2 + $0x19a] sm:$0xff]
    %v718 = vld [vmem:[#allocation2 + $0x1a2] sm:$0xff]
    %v719 = vperm.slane %v215, 2
    %v720 = vmul.f32 %v683, %v719
    %v721 = vmul.f32 %v684, %v719
    %v722 = vmul.f32 %v685, %v719
    %v723 = vmul.f32 %v686, %v719
    %v724 = vmul.f32 %v687, %v719
    %v725 = vmul.f32 %v688, %v719
    %v726 = vmul.f32 %v689, %v719
    %v727 = vmul.f32 %v690, %v719
    %v728 = vmul.f32 %v691, %v719
    %v729 = vmul.f32 %v692, %v719
    %v730 = vmul.f32 %v693, %v719
    %v731 = vmul.f32 %v694, %v719
    %v732 = vmul.f32 %v695, %v719
    %v733 = vmul.f32 %v696, %v719
    %v734 = vmul.f32 %v697, %v719
    %v735 = vmul.f32 %v698, %v719
    %v736 = vmul.f32 %v699, %v719
    %v737 = vmul.f32 %v700, %v719
    %v738 = vmul.f32 %v701, %v719
    %v739 = vmul.f32 %v702, %v719
    %v740 = vmul.f32 %v703, %v719
    %v741 = vmul.f32 %v704, %v719
    %v742 = vmul.f32 %v705, %v719
    %v743 = vmul.f32 %v706, %v719
    %v744 = vmul.f32 %v707, %v719
    %v745 = vmul.f32 %v708, %v719
    %v746 = vmul.f32 %v709, %v719
    %v747 = vmul.f32 %v710, %v719
    %v748 = vmul.f32 %v711, %v719
    %v749 = vmul.f32 %v712, %v719
    %v750 = vmul.f32 %v713, %v719
    %v751 = vmul.f32 %v714, %v719
    %v752 = vadd.f32 %v651, %v720
    %v753 = vadd.f32 %v652, %v721
    %v754 = vadd.f32 %v653, %v722
    %v755 = vadd.f32 %v654, %v723
    %v756 = vadd.f32 %v655, %v724
    %v757 = vadd.f32 %v656, %v725
    %v758 = vadd.f32 %v657, %v726
    %v759 = vadd.f32 %v658, %v727
    %v760 = vadd.f32 %v659, %v728
    %v761 = vadd.f32 %v660, %v729
    %v762 = vadd.f32 %v661, %v730
    %v763 = vadd.f32 %v662, %v731
    %v764 = vadd.f32 %v663, %v732
    %v765 = vadd.f32 %v664, %v733
    %v766 = vadd.f32 %v665, %v734
    %v767 = vadd.f32 %v666, %v735
    %v768 = vadd.f32 %v667, %v736
    %v769 = vadd.f32 %v668, %v737
    %v770 = vadd.f32 %v669, %v738
    %v771 = vadd.f32 %v670, %v739
    %v772 = vadd.f32 %v671, %v740
    %v773 = vadd.f32 %v672, %v741
    %v774 = vadd.f32 %v673, %v742
    %v775 = vadd.f32 %v674, %v743
    %v776 = vadd.f32 %v675, %v744
    %v777 = vadd.f32 %v676, %v745
    %v778 = vadd.f32 %v677, %v746
    %v779 = vadd.f32 %v678, %v747
    %v780 = vadd.f32 %v679, %v748
    %v781 = vadd.f32 %v680, %v749
    %v782 = vadd.f32 %v681, %v750
    %v783 = vadd.f32 %v682, %v751
    %v784 = vperm.slane %v215, 5
    %v785 = vmul.f32 %v685, %v784
    %v786 = vmul.f32 %v686, %v784
    %v787 = vmul.f32 %v687, %v784
    %v788 = vmul.f32 %v688, %v784
    %v789 = vmul.f32 %v689, %v784
    %v790 = vmul.f32 %v690, %v784
    %v791 = vmul.f32 %v691, %v784
    %v792 = vmul.f32 %v692, %v784
    %v793 = vmul.f32 %v693, %v784
    %v794 = vmul.f32 %v694, %v784
    %v795 = vmul.f32 %v695, %v784
    %v796 = vmul.f32 %v696, %v784
    %v797 = vmul.f32 %v697, %v784
    %v798 = vmul.f32 %v698, %v784
    %v799 = vmul.f32 %v699, %v784
    %v800 = vmul.f32 %v700, %v784
    %v801 = vmul.f32 %v701, %v784
    %v802 = vmul.f32 %v702, %v784
    %v803 = vmul.f32 %v703, %v784
    %v804 = vmul.f32 %v704, %v784
    %v805 = vmul.f32 %v705, %v784
    %v806 = vmul.f32 %v706, %v784
    %v807 = vmul.f32 %v707, %v784
    %v808 = vmul.f32 %v708, %v784
    %v809 = vmul.f32 %v709, %v784
    %v810 = vmul.f32 %v710, %v784
    %v811 = vmul.f32 %v711, %v784
    %v812 = vmul.f32 %v712, %v784
    %v813 = vmul.f32 %v713, %v784
    %v814 = vmul.f32 %v714, %v784
    %v815 = vmul.f32 %v715, %v784
    %v816 = vmul.f32 %v716, %v784
    %v817 = vadd.f32 %v752, %v785
    %v818 = vadd.f32 %v753, %v786
    %v819 = vadd.f32 %v754, %v787
    %v820 = vadd.f32 %v755, %v788
    %v821 = vadd.f32 %v756, %v789
    %v822 = vadd.f32 %v757, %v790
    %v823 = vadd.f32 %v758, %v791
    %v824 = vadd.f32 %v759, %v792
    %v825 = vadd.f32 %v760, %v793
    %v826 = vadd.f32 %v761, %v794
    %v827 = vadd.f32 %v762, %v795
    %v828 = vadd.f32 %v763, %v796
    %v829 = vadd.f32 %v764, %v797
    %v830 = vadd.f32 %v765, %v798
    %v831 = vadd.f32 %v766, %v799
    %v832 = vadd.f32 %v767, %v800
    %v833 = vadd.f32 %v768, %v801
    %v834 = vadd.f32 %v769, %v802
    %v835 = vadd.f32 %v770, %v803
    %v836 = vadd.f32 %v771, %v804
    %v837 = vadd.f32 %v772, %v805
    %v838 = vadd.f32 %v773, %v806
    %v839 = vadd.f32 %v774, %v807
    %v840 = vadd.f32 %v775, %v808
    %v841 = vadd.f32 %v776, %v809
    %v842 = vadd.f32 %v777, %v810
    %v843 = vadd.f32 %v778, %v811
    %v844 = vadd.f32 %v779, %v812
    %v845 = vadd.f32 %v780, %v813
    %v846 = vadd.f32 %v781, %v814
    %v847 = vadd.f32 %v782, %v815
    %v848 = vadd.f32 %v783, %v816
    %v849 = vperm.slane %v216, 0
    %v850 = vmul.f32 %v687, %v849
    %v851 = vmul.f32 %v688, %v849
    %v852 = vmul.f32 %v689, %v849
    %v853 = vmul.f32 %v690, %v849
    %v854 = vmul.f32 %v691, %v849
    %v855 = vmul.f32 %v692, %v849
    %v856 = vmul.f32 %v693, %v849
    %v857 = vmul.f32 %v694, %v849
    %v858 = vmul.f32 %v695, %v849
    %v859 = vmul.f32 %v696, %v849
    %v860 = vmul.f32 %v697, %v849
    %v861 = vmul.f32 %v698, %v849
    %v862 = vmul.f32 %v699, %v849
    %v863 = vmul.f32 %v700, %v849
    %v864 = vmul.f32 %v701, %v849
    %v865 = vmul.f32 %v702, %v849
    %v866 = vmul.f32 %v703, %v849
    %v867 = vmul.f32 %v704, %v849
    %v868 = vmul.f32 %v705, %v849
    %v869 = vmul.f32 %v706, %v849
    %v870 = vmul.f32 %v707, %v849
    %v871 = vmul.f32 %v708, %v849
    %v872 = vmul.f32 %v709, %v849
    %v873 = vmul.f32 %v710, %v849
    %v874 = vmul.f32 %v711, %v849
    %v875 = vmul.f32 %v712, %v849
    %v876 = vmul.f32 %v713, %v849
    %v877 = vmul.f32 %v714, %v849
    %v878 = vmul.f32 %v715, %v849
    %v879 = vmul.f32 %v716, %v849
    %v880 = vmul.f32 %v717, %v849
    %v881 = vmul.f32 %v718, %v849
    %v882 = vadd.f32 %v817, %v850
    %v883 = vadd.f32 %v818, %v851
    %v884 = vadd.f32 %v819, %v852
    %v885 = vadd.f32 %v820, %v853
    %v886 = vadd.f32 %v821, %v854
    %v887 = vadd.f32 %v822, %v855
    %v888 = vadd.f32 %v823, %v856
    %v889 = vadd.f32 %v824, %v857
    %v890 = vadd.f32 %v825, %v858
    %v891 = vadd.f32 %v826, %v859
    %v892 = vadd.f32 %v827, %v860
    %v893 = vadd.f32 %v828, %v861
    %v894 = vadd.f32 %v829, %v862
    %v895 = vadd.f32 %v830, %v863
    %v896 = vadd.f32 %v831, %v864
    %v897 = vadd.f32 %v832, %v865
    %v898 = vadd.f32 %v833, %v866
    %v899 = vadd.f32 %v834, %v867
    %v900 = vadd.f32 %v835, %v868
    %v901 = vadd.f32 %v836, %v869
    %v902 = vadd.f32 %v837, %v870
    %v903 = vadd.f32 %v838, %v871
    %v904 = vadd.f32 %v839, %v872
    %v905 = vadd.f32 %v840, %v873
    %v906 = vadd.f32 %v841, %v874
    %v907 = vadd.f32 %v842, %v875
    %v908 = vadd.f32 %v843, %v876
    %v909 = vadd.f32 %v844, %v877
    %v910 = vadd.f32 %v845, %v878
    %v911 = vadd.f32 %v846, %v879
    %v912 = vadd.f32 %v847, %v880
    %v913 = vadd.f32 %v848, %v881
    %914 = vxpose.xlu0.b32.start [1/16] %v882, 128
    %915 = vxpose.xlu0.b32.cont [2/16] %v883, 128
    %916 = vxpose.xlu0.b32.cont [3/16] %v884, 128
    %917 = vxpose.xlu0.b32.cont [4/16] %v885, 128
    %918 = vxpose.xlu0.b32.cont [5/16] %v886, 128
    %919 = vxpose.xlu0.b32.cont [6/16] %v887, 128
    %920 = vxpose.xlu0.b32.cont [7/16] %v888, 128
    %921 = vxpose.xlu0.b32.cont [8/16] %v889, 128
    %922 = vxpose.xlu0.b32.cont [9/16] %v890, 128
    %923 = vxpose.xlu0.b32.cont [10/16] %v891, 128
    %924 = vxpose.xlu0.b32.cont [11/16] %v892, 128
    %925 = vxpose.xlu0.b32.cont [12/16] %v893, 128
    %926 = vxpose.xlu0.b32.cont [13/16] %v894, 128
    %927 = vxpose.xlu0.b32.cont [14/16] %v895, 128
    %928 = vxpose.xlu0.b32.cont [15/16] %v896, 128
    %929 = vxpose.xlu0.b32.end [16/16] %v897, 128
    %v930 = vpop.trf.xlu0
    %v931 = vpop.trf.xlu0
    %v932 = vpop.trf.xlu0
    %v933 = vpop.trf.xlu0
    %v934 = vpop.trf.xlu0
    %v935 = vpop.trf.xlu0
    %v936 = vpop.trf.xlu0
    %v937 = vpop.trf.xlu0
    %v938 = vpop.trf.xlu0
    %v939 = vpop.trf.xlu0
    %v940 = vpop.trf.xlu0
    %v941 = vpop.trf.xlu0
    %v942 = vpop.trf.xlu0
    %v943 = vpop.trf.xlu0
    %v944 = vpop.trf.xlu0
    %v945 = vpop.trf.xlu0
    %946 = vxpose.xlu0.b32.start [1/16] %v898, 128
    %947 = vxpose.xlu0.b32.cont [2/16] %v899, 128
    %948 = vxpose.xlu0.b32.cont [3/16] %v900, 128
    %949 = vxpose.xlu0.b32.cont [4/16] %v901, 128
    %950 = vxpose.xlu0.b32.cont [5/16] %v902, 128
    %951 = vxpose.xlu0.b32.cont [6/16] %v903, 128
    %952 = vxpose.xlu0.b32.cont [7/16] %v904, 128
    %953 = vxpose.xlu0.b32.cont [8/16] %v905, 128
    %954 = vxpose.xlu0.b32.cont [9/16] %v906, 128
    %955 = vxpose.xlu0.b32.cont [10/16] %v907, 128
    %956 = vxpose.xlu0.b32.cont [11/16] %v908, 128
    %957 = vxpose.xlu0.b32.cont [12/16] %v909, 128
    %958 = vxpose.xlu0.b32.cont [13/16] %v910, 128
    %959 = vxpose.xlu0.b32.cont [14/16] %v911, 128
    %960 = vxpose.xlu0.b32.cont [15/16] %v912, 128
    %961 = vxpose.xlu0.b32.end [16/16] %v913, 128
    %v962 = vpop.trf.xlu0
    %v963 = vpop.trf.xlu0
    %v964 = vpop.trf.xlu0
    %v965 = vpop.trf.xlu0
    %v966 = vpop.trf.xlu0
    %v967 = vpop.trf.xlu0
    %v968 = vpop.trf.xlu0
    %v969 = vpop.trf.xlu0
    %v970 = vpop.trf.xlu0
    %v971 = vpop.trf.xlu0
    %v972 = vpop.trf.xlu0
    %v973 = vpop.trf.xlu0
    %v974 = vpop.trf.xlu0
    %v975 = vpop.trf.xlu0
    %v976 = vpop.trf.xlu0
    %v977 = vpop.trf.xlu0
    %978 = vst [vmem:[#allocation8] sm:$0xff] %v930
    %979 = vst [vmem:[#allocation8 + $0x8] sm:$0xff] %v962
    %980 = vst [vmem:[#allocation8 + $0x10] sm:$0xff] %v931
    %981 = vst [vmem:[#allocation8 + $0x18] sm:$0xff] %v963
    %982 = vst [vmem:[#allocation8 + $0x20] sm:$0xff] %v932
    %983 = vst [vmem:[#allocation8 + $0x28] sm:$0xff] %v964
    %984 = vst [vmem:[#allocation8 + $0x30] sm:$0xff] %v933
    %985 = vst [vmem:[#allocation8 + $0x38] sm:$0xff] %v965
    %986 = vst [vmem:[#allocation8 + $0x40] sm:$0xff] %v934
    %987 = vst [vmem:[#allocation8 + $0x48] sm:$0xff] %v966
    %988 = vst [vmem:[#allocation8 + $0x50] sm:$0xff] %v935
    %989 = vst [vmem:[#allocation8 + $0x58] sm:$0xff] %v967
    %990 = vst [vmem:[#allocation8 + $0x60] sm:$0xff] %v936
    %991 = vst [vmem:[#allocation8 + $0x68] sm:$0xff] %v968
    %992 = vst [vmem:[#allocation8 + $0x70] sm:$0xff] %v937
    %993 = vst [vmem:[#allocation8 + $0x78] sm:$0xff] %v969
    %994 = vst [vmem:[#allocation8 + $0x80] sm:$0xff] %v938
    %995 = vst [vmem:[#allocation8 + $0x88] sm:$0xff] %v970
    %996 = vst [vmem:[#allocation8 + $0x90] sm:$0xff] %v939
    %997 = vst [vmem:[#allocation8 + $0x98] sm:$0xff] %v971
    %998 = vst [vmem:[#allocation8 + $0xa0] sm:$0xff] %v940
    %999 = vst [vmem:[#allocation8 + $0xa8] sm:$0xff] %v972
    %1000 = vst [vmem:[#allocation8 + $0xb0] sm:$0xff] %v941
    %1001 = vst [vmem:[#allocation8 + $0xb8] sm:$0xff] %v973
    %1002 = vst [vmem:[#allocation8 + $0xc0] sm:$0xff] %v942
    %1003 = vst [vmem:[#allocation8 + $0xc8] sm:$0xff] %v974
    %1004 = vst [vmem:[#allocation8 + $0xd0] sm:$0xff] %v943
    %1005 = vst [vmem:[#allocation8 + $0xd8] sm:$0xff] %v975
    %1006 = vst [vmem:[#allocation8 + $0xe0] sm:$0xff] %v944
    %1007 = vst [vmem:[#allocation8 + $0xe8] sm:$0xff] %v976
    %1008 = vst [vmem:[#allocation8 + $0xf0] sm:$0xff] %v945
    %1009 = vst [vmem:[#allocation8 + $0xf8] sm:$0xff] %v977
    // Predicated region
    $region22: #{tpu_custom_call.1} parent=1 // pred_check
      _
    $region23: #{tpu_custom_call.1} parent=1 // pred_check_branch
      %1011 = sbr.rel (0) target = $region25
    $region24: #{tpu_custom_call.1} parent=1 // pred_region
      %1013 = vsyncadd [#allocation5], 0
      %s1014 = sshll.u32 [#allocation8], 4
      %s1015 = int_to_ptr.vmem [resolvable:$true] %s1014
      %s1016 = sshll.u32 %s3, 4
      %s1017 = int_to_ptr.hbm [resolvable:$true] %s1016
      %1022 = dma.vmem_to_hbm [thread:$0]  %s1015, 4096, %s1017, [#allocation5], 256, 256, 16
    $region25: #{tpu_custom_call.1} parent=1 // pred_fallthru
      _
    // Predicated region
    $region26: #{tpu_custom_call.1} parent=1 // pred_check
      _
    $region27: #{tpu_custom_call.1} parent=1 // pred_check_branch
      %1024 = sbr.rel (0) target = $region29
    $region28: #{tpu_custom_call.1} parent=1 // pred_region
      %1026 = dma.done [#allocation5], 4096
    $region29: #{tpu_custom_call.1} parent=1 // pred_fallthru
      _
    %1027 = vsyncpa [#allocation4], 1
    %1028 = vsyncpa [#allocation7], 1
    %1029 = vsyncpa [#allocation5], 1

</llo_original>
